<compile_context>
chip_gen: v7x
topology: tpu7x:2x2x1
jax: 0.10.0
libtpu: 0.0.40
codegen_flags: <defaults>
</compile_context>

<pallas_src>
import functools
import math

import jax
import jax.numpy as jnp
from jax import lax
from jax.experimental import pallas as pl
from jax.experimental.pallas import tpu as pltpu


def _round_up(x, m):
    return ((x + m - 1) // m) * m


# --------------------------------------------------------------------------
# Prologue: h = x @ W,  s_src[i] = a1 . h_i  ([N,1]),  s_dst[j] = a2 . h_j ([1,N])
# --------------------------------------------------------------------------
def _prologue_kernel(x_ref, w_ref, a1_ref, a2_ref, h_ref, ssrc_ref, sdst_ref):
    h = jnp.dot(x_ref[...], w_ref[...], preferred_element_type=jnp.float32)
    h_ref[...] = h
    # contract the feature axes directly (no transposes needed)
    ssrc_ref[...] = lax.dot_general(
        h, a1_ref[...], (((1,), (1,)), ((), ())),
        preferred_element_type=jnp.float32)                      # [TR, 1]
    sdst_ref[...] = lax.dot_general(
        a2_ref[...], h, (((1,), (1,)), ((), ())),
        preferred_element_type=jnp.float32)                      # [1, TR]


# --------------------------------------------------------------------------
# Main: tiled masked attention with column-axis reduction.
# --------------------------------------------------------------------------
def _sp_gat_tile_kernel(ssrc_ref, sdst_ref, adj_ref, h_ref, out_ref,
                        acc_ref, rowsum_ref, *, alpha, use_bf16_matmul):
    j = pl.program_id(1)

    @pl.when(j == 0)
    def _init():
        acc_ref[...] = jnp.zeros_like(acc_ref)
        rowsum_ref[...] = jnp.zeros_like(rowsum_ref)

    # score[i, j] = a1.h_i + a2.h_j  on this (TM, TN) tile
    score = ssrc_ref[...] + sdst_ref[...]                         # [TM, TN]
    # LeakyReLU(alpha<1) as a single VALU max instead of cmp+select
    leaky = jnp.maximum(score, alpha * score)
    # adjacency streamed as int8 {0,1}; mask-multiply (one vmul)
    mask = adj_ref[...].astype(jnp.float32)
    e = jnp.exp(-leaky) * mask                                    # [TM, TN]

    rowsum_ref[...] += jnp.sum(e, axis=1, keepdims=True)

    h_j = h_ref[...]                                              # [TN, Fp]
    if use_bf16_matmul:   # optional: faster MXU feed on v6e/v7x (bf16 operands)
        e_mm = e.astype(jnp.bfloat16)
        h_mm = h_j.astype(jnp.bfloat16)
    else:
        e_mm = e
        h_mm = h_j
    acc_ref[...] += jnp.dot(e_mm, h_mm, preferred_element_type=jnp.float32)

    @pl.when(j == pl.num_programs(1) - 1)
    def _finalize():
        inv = pl.reciprocal(rowsum_ref[...], approx=False)        # [TM, 1]
        hp = acc_ref[...] * inv                                   # [TM, Fp]
        # concat=True -> ELU (alpha=1.0, PyTorch default)
        out_ref[...] = jnp.where(hp > 0, hp, jnp.exp(hp) - 1.0)


def sp_graph_attention(x, W, a, adj, *, alpha=0.2, use_bf16_matmul=False):
    N, Din = x.shape
    F = W.shape[1]
    assert a.shape == (1, 2 * F)
    assert adj.shape == (N, N)
    f32 = jnp.float32

    # ---- padding: F -> multiple of 128 lanes, N -> multiple of the tile size.
    Fp = _round_up(F, 128)
    Np = _round_up(N, 128)
    # Tile sizes: sized well under the 64 MiB v7x VMEM (with double-buffering),
    # and also fine on 128 MiB v5e/v6e.
    TM = 256 if Np % 256 == 0 else 128
    TN = 512 if Np % 512 == 0 else (256 if Np % 256 == 0 else 128)
    TR = TM

    x_p = jnp.zeros((Np, Din), f32).at[:N, :].set(x.astype(f32))
    W_p = jnp.zeros((Din, Fp), f32).at[:, :F].set(W.astype(f32))
    a1_p = jnp.zeros((1, Fp), f32).at[:, :F].set(a[:, :F].astype(f32))
    a2_p = jnp.zeros((1, Fp), f32).at[:, :F].set(a[:, F:].astype(f32))
    # int8 edge mask: only nonzero *positions* of adj matter (matches .nonzero()).
    adj_mask = jnp.zeros((Np, Np), jnp.int8).at[:N, :N].set(
        (adj != 0).astype(jnp.int8))

    cparams = pltpu.CompilerParams(
        dimension_semantics=("parallel",),
        vmem_limit_bytes=32 * 1024 * 1024,
    )

    # ---- prologue pallas_call ----
    h, s_src, s_dst = pl.pallas_call(
        _prologue_kernel,
        out_shape=(
            jax.ShapeDtypeStruct((Np, Fp), f32),
            jax.ShapeDtypeStruct((Np, 1), f32),
            jax.ShapeDtypeStruct((1, Np), f32),
        ),
        grid_spec=pltpu.PrefetchScalarGridSpec(
            num_scalar_prefetch=0,
            grid=(Np // TR,),
            in_specs=[
                pl.BlockSpec((TR, Din), lambda r: (r, 0)),
                pl.BlockSpec((Din, Fp), lambda r: (0, 0)),   # resident across grid
                pl.BlockSpec((1, Fp), lambda r: (0, 0)),     # resident across grid
                pl.BlockSpec((1, Fp), lambda r: (0, 0)),     # resident across grid
            ],
            out_specs=[
                pl.BlockSpec((TR, Fp), lambda r: (r, 0)),
                pl.BlockSpec((TR, 1), lambda r: (r, 0)),
                pl.BlockSpec((1, TR), lambda r: (0, r)),
            ],
        ),
        compiler_params=cparams,
    )(x_p, W_p, a1_p, a2_p)

    # ---- main tiled attention pallas_call ----
    kernel = functools.partial(_sp_gat_tile_kernel,
                               alpha=float(alpha),
                               use_bf16_matmul=use_bf16_matmul)
    cost = pl.CostEstimate(
        flops=2 * Np * Np * Fp + 6 * Np * Np + 2 * Np * Din * Fp,
        transcendentals=Np * Np + Np * Fp,
        bytes_accessed=Np * Np * 1 + (Np // TM) * Np * Fp * 4 + 3 * Np * Fp * 4,
    )
    out_p = pl.pallas_call(
        kernel,
        out_shape=jax.ShapeDtypeStruct((Np, Fp), f32),
        grid_spec=pltpu.PrefetchScalarGridSpec(
            num_scalar_prefetch=0,
            grid=(Np // TM, Np // TN),
            in_specs=[
                pl.BlockSpec((TM, 1), lambda i, j: (i, 0)),    # s_src row tile
                pl.BlockSpec((1, TN), lambda i, j: (0, j)),    # s_dst col tile
                pl.BlockSpec((TM, TN), lambda i, j: (i, j)),   # adj mask (int8)
                pl.BlockSpec((TN, Fp), lambda i, j: (j, 0)),   # h_j column tile
            ],
            out_specs=pl.BlockSpec((TM, Fp), lambda i, j: (i, 0)),
            scratch_shapes=[
                pltpu.VMEM((TM, Fp), jnp.float32),   # acc
                pltpu.VMEM((TM, 1), jnp.float32),    # rowsum
            ],
        ),
        compiler_params=pltpu.CompilerParams(
            dimension_semantics=("parallel", "arbitrary"),
            vmem_limit_bytes=32 * 1024 * 1024,
        ),
        cost_estimate=cost,
    )(s_src, s_dst, adj_mask, h)

    return out_p[:N, :F]


def reference_dense(x, W, a, adj, *, alpha=0.2):
    """Plain-JAX reference mirroring the PyTorch sparse semantics (dense-masked)."""
    F_ = W.shape[1]
    hi = lax.Precision.HIGHEST
    h = jnp.dot(x, W, precision=hi)
    s_src = jnp.dot(h, a[:, :F_].T, precision=hi)   # [N, 1]
    s_dst = jnp.dot(h, a[:, F_:].T, precision=hi)   # [N, 1]
    score = s_src + s_dst.T                         # [N, N]
    leaky = jnp.where(score > 0, score, alpha * score)
    e = jnp.where(adj != 0, jnp.exp(-leaky), 0.0)
    rowsum = e.sum(axis=1, keepdims=True)
    h_prime = jnp.dot(e, h, precision=hi) / rowsum
    return jnp.where(h_prime > 0, h_prime, jnp.exp(h_prime) - 1.0)


if __name__ == "__main__":
    key = jax.random.PRNGKey(0)
    k_x, k_w, k_a, k_adj = jax.random.split(key, 4)

    N = 300              # number of graph nodes (exercises padding + 3x3 grid)
    in_features = 16
    out_features = 64
    alpha = 0.2          # LeakyReLU negative slope
    gain = 1.414         # xavier_normal_ gain used in the module

    # xavier_normal_: std = gain * sqrt(2 / (fan_in + fan_out))
    w_std = gain * math.sqrt(2.0 / (in_features + out_features))
    a_std = gain * math.sqrt(2.0 / (1 + 2 * out_features))

    x = jax.random.normal(k_x, (N, in_features), dtype=jnp.float32)
    W = w_std * jax.random.normal(k_w, (in_features, out_features), dtype=jnp.float32)
    a = a_std * jax.random.normal(k_a, (1, 2 * out_features), dtype=jnp.float32)

    # Deterministic sparse adjacency with self-loops (guarantees nonzero rowsum,
    # matching the PyTorch code's implicit no-NaN requirement).
    adj = (jax.random.uniform(k_adj, (N, N)) < 0.05).astype(jnp.float32)
    adj = jnp.maximum(adj, jnp.eye(N, dtype=jnp.float32))

    out = sp_graph_attention(x, W, a, adj, alpha=alpha)
    out = jax.block_until_ready(out)

    ref = reference_dense(x, W, a, adj, alpha=alpha)
    assert out.shape == (N, out_features)
    assert not bool(jnp.isnan(out).any())
    assert bool(jnp.allclose(out, ref, atol=1e-4, rtol=1e-4))

    print("KERNEL_OK")
</pallas_src>

<mosaic_0001>
module attributes {stable_mosaic.version = 11 : i64} {
  func.func @_prologue_kernel(%arg0: i32, %arg1: memref<128x16xf32, #tpu.memory_space<vmem>>, %arg2: memref<16x128xf32, #tpu.memory_space<vmem>>, %arg3: memref<1x128xf32, #tpu.memory_space<vmem>>, %arg4: memref<1x128xf32, #tpu.memory_space<vmem>>, %arg5: memref<128x128xf32, #tpu.memory_space<vmem>>, %arg6: memref<128x1xf32, #tpu.memory_space<vmem>>, %arg7: memref<1x128xf32, #tpu.memory_space<vmem>>) attributes {dimension_semantics = [#tpu.dimension_semantics<parallel>], iteration_bounds = array<i64: 3>, scalar_prefetch = 0 : i64, scratch_operands = 0 : i64, tpu.core_type = #tpu.core_type<tc>, window_params = [{transform_indices = @transform_0, window_bounds = array<i64: 128, 16>}, {pipeline_mode = #tpu.pipeline_mode<synchronous>, transform_indices = @transform_1, window_bounds = array<i64: 16, 128>}, {pipeline_mode = #tpu.pipeline_mode<synchronous>, transform_indices = @transform_2, window_bounds = array<i64: 1, 128>}, {pipeline_mode = #tpu.pipeline_mode<synchronous>, transform_indices = @transform_3, window_bounds = array<i64: 1, 128>}, {transform_indices = @transform_4, window_bounds = array<i64: 128, 128>}, {transform_indices = @transform_5, window_bounds = array<i64: 128, 1>}, {transform_indices = @transform_6, window_bounds = array<i64: 1, 128>}]} {
    %c0 = arith.constant 0 : index
    %c0_0 = arith.constant 0 : index
    %0 = vector.load %arg1[%c0, %c0_0] : memref<128x16xf32, #tpu.memory_space<vmem>>, vector<128x16xf32>
    %c0_1 = arith.constant 0 : index
    %c0_2 = arith.constant 0 : index
    %1 = vector.load %arg2[%c0_1, %c0_2] : memref<16x128xf32, #tpu.memory_space<vmem>>, vector<16x128xf32>
    %cst = arith.constant dense<0.000000e+00> : vector<128x128xf32>
    %2 = tpu.matmul %0, %1, %cst {dimension_numbers = #tpu.dot_dimension_numbers<[1], [0], [0], [1], [0, 0, 1, 1], [], []>} : vector<128x16xf32>, vector<16x128xf32>, vector<128x128xf32> -> vector<128x128xf32>
    %c0_3 = arith.constant 0 : index
    %c0_4 = arith.constant 0 : index
    %3 = vector.load %arg5[%c0_3, %c0_4] : memref<128x128xf32, #tpu.memory_space<vmem>>, vector<128x128xf32>
    tpu.vector_store %arg5[%c0_3, %c0_4], %2 {strides = array<i32>} : memref<128x128xf32, #tpu.memory_space<vmem>>, vector<128x128xf32>,
    %c0_5 = arith.constant 0 : index
    %c0_6 = arith.constant 0 : index
    %4 = vector.load %arg3[%c0_5, %c0_6] : memref<1x128xf32, #tpu.memory_space<vmem>>, vector<1x128xf32>
    %cst_7 = arith.constant dense<0.000000e+00> : vector<128x1xf32>
    %5 = tpu.matmul %2, %4, %cst_7 {dimension_numbers = #tpu.dot_dimension_numbers<[1], [1], [0], [0], [0, 0, 1, 0], [], []>} : vector<128x128xf32>, vector<1x128xf32>, vector<128x1xf32> -> vector<128x1xf32>
    %c0_8 = arith.constant 0 : index
    %c0_9 = arith.constant 0 : index
    %6 = vector.load %arg6[%c0_8, %c0_9] : memref<128x1xf32, #tpu.memory_space<vmem>>, vector<128x1xf32>
    tpu.vector_store %arg6[%c0_8, %c0_9], %5 {strides = array<i32>} : memref<128x1xf32, #tpu.memory_space<vmem>>, vector<128x1xf32>,
    %c0_10 = arith.constant 0 : index
    %c0_11 = arith.constant 0 : index
    %7 = vector.load %arg4[%c0_10, %c0_11] : memref<1x128xf32, #tpu.memory_space<vmem>>, vector<1x128xf32>
    %cst_12 = arith.constant dense<0.000000e+00> : vector<1x128xf32>
    %8 = tpu.matmul %7, %2, %cst_12 {dimension_numbers = #tpu.dot_dimension_numbers<[1], [1], [0], [0], [0, 0, 1, 0], [], []>} : vector<1x128xf32>, vector<128x128xf32>, vector<1x128xf32> -> vector<1x128xf32>
    %c0_13 = arith.constant 0 : index
    %c0_14 = arith.constant 0 : index
    %9 = vector.load %arg7[%c0_13, %c0_14] : memref<1x128xf32, #tpu.memory_space<vmem>>, vector<1x128xf32>
    tpu.vector_store %arg7[%c0_13, %c0_14], %8 {strides = array<i32>} : memref<1x128xf32, #tpu.memory_space<vmem>>, vector<1x128xf32>,
    return
  }
  func.func @transform_0(%arg0: i32) -> (i32, i32) {
    %c0_i32 = arith.constant 0 : i32
    %c0_i32_0 = arith.constant 0 : i32
    return %arg0, %c0_i32 : i32, i32
  }
  func.func @transform_1(%arg0: i32) -> (i32, i32) {
    %c0_i32 = arith.constant 0 : i32
    %c0_i32_0 = arith.constant 0 : i32
    %c0_i32_1 = arith.constant 0 : i32
    return %c0_i32, %c0_i32_0 : i32, i32
  }
  func.func @transform_2(%arg0: i32) -> (i32, i32) {
    %c0_i32 = arith.constant 0 : i32
    %c0_i32_0 = arith.constant 0 : i32
    %c0_i32_1 = arith.constant 0 : i32
    return %c0_i32, %c0_i32_0 : i32, i32
  }
  func.func @transform_3(%arg0: i32) -> (i32, i32) {
    %c0_i32 = arith.constant 0 : i32
    %c0_i32_0 = arith.constant 0 : i32
    %c0_i32_1 = arith.constant 0 : i32
    return %c0_i32, %c0_i32_0 : i32, i32
  }
  func.func @transform_4(%arg0: i32) -> (i32, i32) {
    %c0_i32 = arith.constant 0 : i32
    %c0_i32_0 = arith.constant 0 : i32
    return %arg0, %c0_i32 : i32, i32
  }
  func.func @transform_5(%arg0: i32) -> (i32, i32) {
    %c0_i32 = arith.constant 0 : i32
    %c0_i32_0 = arith.constant 0 : i32
    return %arg0, %c0_i32 : i32, i32
  }
  func.func @transform_6(%arg0: i32) -> (i32, i32) {
    %c0_i32 = arith.constant 0 : i32
    %c0_i32_0 = arith.constant 0 : i32
    return %c0_i32, %arg0 : i32, i32
  }
}

</mosaic_0001>

<llo_original>
// kernel: tpu_custom_call.1
$region0: #{tpu_custom_call.1}
  #allocation0 [shape = 'u32[]', space=smem, size = 0x4, offset = 0x4, fixed_abs, tag = 'smem constant byte address 0x4 - core index']
  #allocation1 [shape = 'u32[144,128]{1,0:T(1,128)}', space=vmem, size = 0x12000, scoped, tag = 'internal scratch']
  %s0 = inlined_call_operand.vmem [shape: f32[384,16], index: 0, kind: input, shape index: {}]
  %s1 = inlined_call_operand.vmem [shape: f32[16,128], index: 1, kind: input, shape index: {}]
  %s2 = inlined_call_operand.vmem [shape: f32[1,128], index: 2, kind: input, shape index: {}]
  %s3 = inlined_call_operand.vmem [shape: f32[1,128], index: 3, kind: input, shape index: {}]
  %s4 = inlined_call_operand.hbm [shape: f32[384,128], index: 4, kind: output, shape index: {0}]
  %s5 = inlined_call_operand.vmem [shape: f32[384,1], index: 5, kind: output, shape index: {1}]
  %s6 = inlined_call_operand.hbm [shape: f32[1,384], index: 6, kind: output, shape index: {2}]
  %7 = xla_tuple %s4, %s5, %s6
  %s8 = sld [smem:[#allocation0]]
  $region65: #{tpu_custom_call.1} parent=0
    _
  %s10 = ssub.s32 1, %s8
  %s11 = scalar_select 0, %s10, %s8
  $region1: #{tpu_custom_call.1} parent=0
    #allocation2 [shape = 'u8[131072]{0}', space=vmem, size = 0x20000, scoped, tag = 'output window, operand 0']
    #allocation3 [shape = 's32[2]{0}', space=sflag, size = 0x8, scoped, tag = 'scoped memory for tpu_custom_call.1']
    #allocation4 [shape = 'u8[1024]{0}', space=vmem, size = 0x400, scoped, tag = 'output window, operand 2']
    #allocation5 [shape = 's32[2]{0}', space=sflag, size = 0x8, scoped, tag = 'scoped memory for tpu_custom_call.1']
    %12 = vsyncpa [#allocation3], 0
    %s13 = scalar_lea.sflag [#allocation3], 1
    %14 = vsyncpa %s13, 0
    %15 = vsyncpa [#allocation5], 0
    %s16 = scalar_lea.sflag [#allocation5], 1
    %17 = vsyncpa %s16, 0
    loop: start=0, step=1, limit=5
    $region2: #{tpu_custom_call.1} parent=1 // loop_pre_header
      _
    $region3: #{tpu_custom_call.1} parent=1 // loop_header
      %s19 = sphi 0, %s23
      %p20 = scmp.ge.s32.totalorder %s19, 5
      %s29 = sphi 0, %s31
      %s32 = sphi 0, %s29
      %s33 = sphi 0, %s32
      %s49 = sphi 0, %s33
      %s53 = sphi 0, %s53
      %s55 = sphi 0, %s53
      %s56 = sphi 0, %s55
      %s70 = sphi 0, %s56
      %s74 = sphi 0, %s74
      %s76 = sphi 0, %s74
      %s77 = sphi 0, %s76
      %s91 = sphi 0, %s77
      %s95 = sphi 0, %s95
      %s97 = sphi 0, %s95
      %s98 = sphi 0, %s97
      %s112 = sphi 0, %s98
      %s118 = sphi 0, %s120
      %s121 = sphi 0, %s118
      %s122 = sphi 0, %s121
      %s138 = sphi 0, %s122
      %s144 = sphi 0, %s146
      %s147 = sphi 0, %s144
      %s148 = sphi 0, %s147
      %s164 = sphi 0, %s148
      %s170 = sphi 0, %s172
      %s173 = sphi 0, %s170
      %s174 = sphi 0, %s173
      %s190 = sphi 0, %s174
    $region4: #{tpu_custom_call.1} parent=1 // loop_header_branch
      %22 = sbr.rel (%p20) target = $region8
    $region5: #{tpu_custom_call.1} parent=1 // loop_body
      %s24 = ssub.s32 %s19, 1
      %s25 = ssub.s32 %s19, 2
      %s26 = sadd.s32 %s19, 1
      %s27 = ssub.s32 %s19, %s26
      %p28 = scmp.eq.s32.totalorder %s27, 0
      %s30 = sadd.s32 %s29, 1
      %s31 = scalar_select %p28, %s29, %s30
      %p34 = pneg %p28
      %p35 = scmp.eq.s32.totalorder %s19, 2
      %p36 = por %p34, %p35
      %p37 = scmp.ne.s32.totalorder %s29, %s32
      %p38 = scmp.eq.s32.totalorder %s19, 0
      %p39 = por %p37, %p38
      %p40 = scmp.ne.s32.totalorder %s29, %s32
      %p41 = scmp.eq.s32.totalorder %s24, 2
      %p42 = por %p40, %p41
      %p43 = scmp.ne.s32.totalorder %s32, %s33
      %p44 = scmp.eq.s32.totalorder %s24, 0
      %p45 = por %p43, %p44
      %p46 = scmp.ne.s32.totalorder %s32, %s33
      %p47 = scmp.eq.s32.totalorder %s25, 2
      %p48 = por %p46, %p47
      %p50 = scmp.ne.s32.totalorder %s33, %s49
      %p51 = scmp.eq.s32.totalorder %s25, 0
      %p52 = por %p50, %p51
      %s54 = sadd.s32 %s53, 1
      %p57 = scmp.eq.s32.totalorder %s19, 2
      %p58 = scmp.ne.s32.totalorder %s53, %s55
      %p59 = scmp.eq.s32.totalorder %s19, 0
      %p60 = por %p58, %p59
      %p61 = scmp.ne.s32.totalorder %s53, %s55
      %p62 = scmp.eq.s32.totalorder %s24, 2
      %p63 = por %p61, %p62
      %p64 = scmp.ne.s32.totalorder %s55, %s56
      %p65 = scmp.eq.s32.totalorder %s24, 0
      %p66 = por %p64, %p65
      %p67 = scmp.ne.s32.totalorder %s55, %s56
      %p68 = scmp.eq.s32.totalorder %s25, 2
      %p69 = por %p67, %p68
      %p71 = scmp.ne.s32.totalorder %s56, %s70
      %p72 = scmp.eq.s32.totalorder %s25, 0
      %p73 = por %p71, %p72
      %s75 = sadd.s32 %s74, 1
      %p78 = scmp.eq.s32.totalorder %s19, 2
      %p79 = scmp.ne.s32.totalorder %s74, %s76
      %p80 = scmp.eq.s32.totalorder %s19, 0
      %p81 = por %p79, %p80
      %p82 = scmp.ne.s32.totalorder %s74, %s76
      %p83 = scmp.eq.s32.totalorder %s24, 2
      %p84 = por %p82, %p83
      %p85 = scmp.ne.s32.totalorder %s76, %s77
      %p86 = scmp.eq.s32.totalorder %s24, 0
      %p87 = por %p85, %p86
      %p88 = scmp.ne.s32.totalorder %s76, %s77
      %p89 = scmp.eq.s32.totalorder %s25, 2
      %p90 = por %p88, %p89
      %p92 = scmp.ne.s32.totalorder %s77, %s91
      %p93 = scmp.eq.s32.totalorder %s25, 0
      %p94 = por %p92, %p93
      %s96 = sadd.s32 %s95, 1
      %p99 = scmp.eq.s32.totalorder %s19, 2
      %p100 = scmp.ne.s32.totalorder %s95, %s97
      %p101 = scmp.eq.s32.totalorder %s19, 0
      %p102 = por %p100, %p101
      %p103 = scmp.ne.s32.totalorder %s95, %s97
      %p104 = scmp.eq.s32.totalorder %s24, 2
      %p105 = por %p103, %p104
      %p106 = scmp.ne.s32.totalorder %s97, %s98
      %p107 = scmp.eq.s32.totalorder %s24, 0
      %p108 = por %p106, %p107
      %p109 = scmp.ne.s32.totalorder %s97, %s98
      %p110 = scmp.eq.s32.totalorder %s25, 2
      %p111 = por %p109, %p110
      %p113 = scmp.ne.s32.totalorder %s98, %s112
      %p114 = scmp.eq.s32.totalorder %s25, 0
      %p115 = por %p113, %p114
      %s116 = ssub.s32 %s19, %s26
      %p117 = scmp.eq.s32.totalorder %s116, 0
      %s119 = sadd.s32 %s118, 1
      %s120 = scalar_select %p117, %s118, %s119
      %p123 = pneg %p117
      %p124 = scmp.eq.s32.totalorder %s19, 2
      %p125 = por %p123, %p124
      %p126 = scmp.ne.s32.totalorder %s118, %s121
      %p127 = scmp.eq.s32.totalorder %s19, 0
      %p128 = por %p126, %p127
      %p129 = scmp.ne.s32.totalorder %s118, %s121
      %p130 = scmp.eq.s32.totalorder %s24, 2
      %p131 = por %p129, %p130
      %p132 = scmp.ne.s32.totalorder %s121, %s122
      %p133 = scmp.eq.s32.totalorder %s24, 0
      %p134 = por %p132, %p133
      %p135 = scmp.ne.s32.totalorder %s121, %s122
      %p136 = scmp.eq.s32.totalorder %s25, 2
      %p137 = por %p135, %p136
      %p139 = scmp.ne.s32.totalorder %s122, %s138
      %p140 = scmp.eq.s32.totalorder %s25, 0
      %p141 = por %p139, %p140
      %s142 = ssub.s32 %s19, %s26
      %p143 = scmp.eq.s32.totalorder %s142, 0
      %s145 = sadd.s32 %s144, 1
      %s146 = scalar_select %p143, %s144, %s145
      %p149 = pneg %p143
      %p150 = scmp.eq.s32.totalorder %s19, 2
      %p151 = por %p149, %p150
      %p152 = scmp.ne.s32.totalorder %s144, %s147
      %p153 = scmp.eq.s32.totalorder %s19, 0
      %p154 = por %p152, %p153
      %p155 = scmp.ne.s32.totalorder %s144, %s147
      %p156 = scmp.eq.s32.totalorder %s24, 2
      %p157 = por %p155, %p156
      %p158 = scmp.ne.s32.totalorder %s147, %s148
      %p159 = scmp.eq.s32.totalorder %s24, 0
      %p160 = por %p158, %p159
      %p161 = scmp.ne.s32.totalorder %s147, %s148
      %p162 = scmp.eq.s32.totalorder %s25, 2
      %p163 = por %p161, %p162
      %p165 = scmp.ne.s32.totalorder %s148, %s164
      %p166 = scmp.eq.s32.totalorder %s25, 0
      %p167 = por %p165, %p166
      %s168 = ssub.s32 %s19, %s26
      %p169 = scmp.eq.s32.totalorder %s168, 0
      %s171 = sadd.s32 %s170, 1
      %s172 = scalar_select %p169, %s170, %s171
      %p175 = pneg %p169
      %p176 = scmp.eq.s32.totalorder %s19, 2
      %p177 = por %p175, %p176
      %p178 = scmp.ne.s32.totalorder %s170, %s173
      %p179 = scmp.eq.s32.totalorder %s19, 0
      %p180 = por %p178, %p179
      %p181 = scmp.ne.s32.totalorder %s170, %s173
      %p182 = scmp.eq.s32.totalorder %s24, 2
      %p183 = por %p181, %p182
      %p184 = scmp.ne.s32.totalorder %s173, %s174
      %p185 = scmp.eq.s32.totalorder %s24, 0
      %p186 = por %p184, %p185
      %p187 = scmp.ne.s32.totalorder %s173, %s174
      %p188 = scmp.eq.s32.totalorder %s25, 2
      %p189 = por %p187, %p188
      %p191 = scmp.ne.s32.totalorder %s174, %s190
      %p192 = scmp.eq.s32.totalorder %s25, 0
      %p193 = por %p191, %p192
      %p194 = scmp.le.s32.totalorder 1, %s19
      %p195 = scmp.lt.s32.totalorder %s19, 4
      %p196 = pnand %p194, %p195
      %p197 = pneg %p196
      // Predicated region
      $region9: #{tpu_custom_call.1} parent=5 // pred_check
        _
      $region10: #{tpu_custom_call.1} parent=5 // pred_check_branch
        %199 = sbr.rel (%p196) target = $region12
      $region11: #{tpu_custom_call.1} parent=5 // pred_region
        %s200 = ssub.s32 %s19, 1
        // Predicated region
        $region13: #{tpu_custom_call.1} parent=11 // pred_check
          %p201 = pneg %p66
        $region14: #{tpu_custom_call.1} parent=11 // pred_check_branch
          %203 = sbr.rel (%p201) target = $region16
        $region15: #{tpu_custom_call.1} parent=11 // pred_region
          _
        $region16: #{tpu_custom_call.1} parent=11 // pred_fallthru
          _
        // Predicated region
        $region17: #{tpu_custom_call.1} parent=11 // pred_check
          %p204 = pneg %p87
        $region18: #{tpu_custom_call.1} parent=11 // pred_check_branch
          %206 = sbr.rel (%p204) target = $region20
        $region19: #{tpu_custom_call.1} parent=11 // pred_region
          _
        $region20: #{tpu_custom_call.1} parent=11 // pred_fallthru
          _
        // Predicated region
        $region21: #{tpu_custom_call.1} parent=11 // pred_check
          %p207 = pneg %p108
        $region22: #{tpu_custom_call.1} parent=11 // pred_check_branch
          %209 = sbr.rel (%p207) target = $region24
        $region23: #{tpu_custom_call.1} parent=11 // pred_region
          _
        $region24: #{tpu_custom_call.1} parent=11 // pred_fallthru
          _
      $region12: #{tpu_custom_call.1} parent=5 // pred_fallthru
        _
      %p210 = scmp.lt.s32.totalorder %s19, 3
      // Predicated region
      $region25: #{tpu_custom_call.1} parent=5 // pred_check
        %p211 = pneg %p210
      $region26: #{tpu_custom_call.1} parent=5 // pred_check_branch
        %213 = sbr.rel (%p211) target = $region28
      $region27: #{tpu_custom_call.1} parent=5 // pred_region
        // Predicated region
        $region29: #{tpu_custom_call.1} parent=27 // pred_check
          %p214 = pneg %p39
        $region30: #{tpu_custom_call.1} parent=27 // pred_check_branch
          %216 = sbr.rel (%p214) target = $region32
        $region31: #{tpu_custom_call.1} parent=27 // pred_region
          %s217 = smul.u32 16, %s19
          %p218 = scmp.lt.s32.totalorder %s217, 47
          %s219 = scalar_select %p218, %s217, 47
          %s220 = smul.addr %s219, 8
          %s221 = scalar_lea.vmem %s0, %s220
          %s222 = smul.u32 16, %s19
        $region32: #{tpu_custom_call.1} parent=27 // pred_fallthru
          _
      $region28: #{tpu_custom_call.1} parent=5 // pred_fallthru
        _
      %p223 = scmp.le.s32.totalorder 1, %s19
      %p224 = scmp.lt.s32.totalorder %s19, 4
      %p225 = pnand %p223, %p224
      %p226 = pneg %p225
      // Predicated region
      $region33: #{tpu_custom_call.1} parent=5 // pred_check
        _
      $region34: #{tpu_custom_call.1} parent=5 // pred_check_branch
        %228 = sbr.rel (%p225) target = $region36
      $region35: #{tpu_custom_call.1} parent=5 // pred_region
        %s229 = ssub.s32 %s19, 1
        %s230 = smul.u32 16, %s24
        %p231 = scmp.lt.s32.totalorder %s230, 47
        %s232 = scalar_select %p231, %s230, 47
        %s233 = smul.addr %s232, 8
        %s234 = scalar_lea.vmem %s0, %s233
        %p235 = pneg %p45
        %p236 = pneg %p42
        %p237 = pneg %p66
        %p238 = pneg %p63
        %p239 = pneg %p87
        %p240 = pneg %p84
        %p241 = pneg %p108
        %p242 = pneg %p105
        %p243 = pneg %p134
        %p244 = pneg %p131
        %s245 = sand.u32 %s121, 1
        %s246 = scalar_lea.sflag [#allocation3], %s245
        %s247 = sand.u32 %s121, 1
        %s248 = smul.addr %s247, 128
        %s249 = scalar_lea.vmem [#allocation2], %s248
        %p250 = pneg %p160
        %p251 = pneg %p157
        %s252 = smul.u32 16, %s24
        %p253 = scmp.lt.s32.totalorder %s252, 47
        %s254 = scalar_select %p253, %s252, 47
        %s255 = smul.addr %s254, 8
        %s256 = scalar_lea.vmem %s5, %s255
        %p257 = pneg %p186
        %p258 = pneg %p183
        %s259 = sand.u32 %s173, 1
        %s260 = scalar_lea.sflag [#allocation5], %s259
        %s261 = sand.u32 %s173, 1
        %s262 = scalar_lea.vmem [#allocation4], %s261
        %s263 = smul.u32 16, %s24
        %p264 = scmp.lt.s32.totalorder %s263, 47
        %s265 = scalar_select %p264, %s263, 47
        %s266 = smul.addr %s265, 8
        %s267 = scalar_lea.vmem %s0, %s266
        %s268 = smul.u32 16, %s24
        %s269 = smul.u32 16, %s24
        %s270 = smul.u32 16, %s24
        %p271 = scmp.lt.s32.totalorder %s270, 47
        %s272 = scalar_select %p271, %s270, 47
        %s273 = smul.addr %s272, 8
        %s274 = scalar_lea.vmem %s5, %s273
        %s275 = smul.u32 16, %s24
        %v276 = vld [vmem:[%s267] sm:$0xff]
        %v277 = vld [vmem:[%s267 + $0x8] sm:$0xff]
        %v278 = vld [vmem:[%s267 + $0x10] sm:$0xff]
        %v279 = vld [vmem:[%s267 + $0x18] sm:$0xff]
        %v280 = vld [vmem:[%s267 + $0x20] sm:$0xff]
        %v281 = vld [vmem:[%s267 + $0x28] sm:$0xff]
        %v282 = vld [vmem:[%s267 + $0x30] sm:$0xff]
        %v283 = vld [vmem:[%s267 + $0x38] sm:$0xff]
        %v284 = vld [vmem:[%s267 + $0x40] sm:$0xff]
        %v285 = vld [vmem:[%s267 + $0x48] sm:$0xff]
        %v286 = vld [vmem:[%s267 + $0x50] sm:$0xff]
        %v287 = vld [vmem:[%s267 + $0x58] sm:$0xff]
        %v288 = vld [vmem:[%s267 + $0x60] sm:$0xff]
        %v289 = vld [vmem:[%s267 + $0x68] sm:$0xff]
        %v290 = vld [vmem:[%s267 + $0x70] sm:$0xff]
        %v291 = vld [vmem:[%s267 + $0x78] sm:$0xff]
        %v292 = vld [vmem:[%s1] sm:$0xff]
        %v293 = vld [vmem:[%s1 + $0x8] sm:$0xff]
        %vm294 = vcmask 130048
        %v296 = vsel %vm294, %v276, 0
        %v299 = vsel %vm294, %v277, 0
        %v302 = vsel %vm294, %v278, 0
        %v305 = vsel %vm294, %v279, 0
        %v308 = vsel %vm294, %v280, 0
        %v311 = vsel %vm294, %v281, 0
        %v314 = vsel %vm294, %v282, 0
        %v317 = vsel %vm294, %v283, 0
        %v320 = vsel %vm294, %v284, 0
        %v323 = vsel %vm294, %v285, 0
        %v326 = vsel %vm294, %v286, 0
        %v329 = vsel %vm294, %v287, 0
        %v332 = vsel %vm294, %v288, 0
        %v335 = vsel %vm294, %v289, 0
        %v338 = vsel %vm294, %v290, 0
        %v341 = vsel %vm294, %v291, 0
        %343 = vmatprep.subr.mxu0 0.0
        %344 = vmatpush1.msra.mxu0 %v292
        %345 = vmatprep.subr.mxu0 0.0
        %346 = vmatpush1.msra.mxu0 %v293
        %347 = vmatprep.subr.mxu0 0.0
        %348 = vmatpush1.msra.mxu0 0.0
        %349 = vmatprep.subr.mxu0 0.0
        %350 = vmatpush1.msra.mxu0 0.0
        %351 = vmatprep.subr.mxu0 0.0
        %352 = vmatpush1.msra.mxu0 0.0
        %353 = vmatprep.subr.mxu0 0.0
        %354 = vmatpush1.msra.mxu0 0.0
        %355 = vmatprep.subr.mxu0 0.0
        %356 = vmatpush1.msra.mxu0 0.0
        %357 = vmatprep.subr.mxu0 0.0
        %358 = vmatpush1.msra.mxu0 0.0
        %359 = vmatprep.subr.mxu0 0.0
        %360 = vmatpush1.msra.mxu0 0.0
        %361 = vmatprep.subr.mxu0 0.0
        %362 = vmatpush1.msra.mxu0 0.0
        %363 = vmatprep.subr.mxu0 0.0
        %364 = vmatpush1.msra.mxu0 0.0
        %365 = vmatprep.subr.mxu0 0.0
        %366 = vmatpush1.msra.mxu0 0.0
        %367 = vmatprep.subr.mxu0 0.0
        %368 = vmatpush1.msra.mxu0 0.0
        %369 = vmatprep.subr.mxu0 0.0
        %370 = vmatpush1.msra.mxu0 0.0
        %371 = vmatprep.subr.mxu0 0.0
        %372 = vmatpush1.msra.mxu0 0.0
        %373 = vmatprep.subr.mxu0 0.0
        %374 = vmatpush1.msra.mxu0 0.0
        %375 = vmatprep.subr.mxu0 0.0
        %376 = vmatpush1.msra.mxu0 0.0
        %377 = vmatprep.subr.mxu0 0.0
        %378 = vmatpush1.msra.mxu0 0.0
        %379 = vmatprep.subr.mxu0 0.0
        %380 = vmatpush1.msra.mxu0 0.0
        %381 = vmatprep.subr.mxu0 0.0
        %382 = vmatpush1.msra.mxu0 0.0
        %383 = vmatprep.subr.mxu0 0.0
        %384 = vmatpush1.msra.mxu0 0.0
        %385 = vmatprep.subr.mxu0 0.0
        %386 = vmatpush1.msra.mxu0 0.0
        %387 = vmatprep.subr.mxu0 0.0
        %388 = vmatpush1.msra.mxu0 0.0
        %389 = vmatprep.subr.mxu0 0.0
        %390 = vmatpush1.msra.mxu0 0.0
        %391 = vmatprep.subr.mxu0 0.0
        %392 = vmatpush1.msra.mxu0 0.0
        %393 = vmatprep.subr.mxu0 0.0
        %394 = vmatpush1.msra.mxu0 0.0
        %395 = vmatprep.subr.mxu0 0.0
        %396 = vmatpush1.msra.mxu0 0.0
        %397 = vmatprep.subr.mxu0 0.0
        %398 = vmatpush1.msra.mxu0 0.0
        %399 = vmatprep.subr.mxu0 0.0
        %400 = vmatpush1.msra.mxu0 0.0
        %401 = vmatprep.subr.mxu0 0.0
        %402 = vmatpush1.msra.mxu0 0.0
        %403 = vmatprep.subr.mxu0 0.0
        %404 = vmatpush1.msra.mxu0 0.0
        %405 = vmatprep.subr.mxu0 0.0
        %406 = vmatpush1.msra.mxu0 0.0
        %407 = vmatprep.mubr.f32.mxu0 0.0
        %408 = vmatmul.mubr.f32.gmra.mrb[0].mxu0 %v296
        %v409 = vpop.f32.mrb[0].mxu0
        %v410 = vadd.f32 0.0, %v409
        %v411 = vpop.f32.mrb[0].mxu0
        %412 = vmatprep.mubr.f32.mxu0 0.0
        %413 = vmatmul.mubr.f32.gmra.mrb[0].mxu0 %v299
        %v414 = vpop.f32.mrb[0].mxu0
        %v415 = vadd.f32 0.0, %v414
        %v416 = vpop.f32.mrb[0].mxu0
        %417 = vmatprep.mubr.f32.mxu0 0.0
        %418 = vmatmul.mubr.f32.gmra.mrb[0].mxu0 %v302
        %v419 = vpop.f32.mrb[0].mxu0
        %v420 = vadd.f32 0.0, %v419
        %v421 = vpop.f32.mrb[0].mxu0
        %422 = vmatprep.mubr.f32.mxu0 0.0
        %423 = vmatmul.mubr.f32.gmra.mrb[0].mxu0 %v305
        %v424 = vpop.f32.mrb[0].mxu0
        %v425 = vadd.f32 0.0, %v424
        %v426 = vpop.f32.mrb[0].mxu0
        %427 = vmatprep.mubr.f32.mxu0 0.0
        %428 = vmatmul.mubr.f32.gmra.mrb[0].mxu0 %v308
        %v429 = vpop.f32.mrb[0].mxu0
        %v430 = vadd.f32 0.0, %v429
        %v431 = vpop.f32.mrb[0].mxu0
        %432 = vmatprep.mubr.f32.mxu0 0.0
        %433 = vmatmul.mubr.f32.gmra.mrb[0].mxu0 %v311
        %v434 = vpop.f32.mrb[0].mxu0
        %v435 = vadd.f32 0.0, %v434
        %v436 = vpop.f32.mrb[0].mxu0
        %437 = vmatprep.mubr.f32.mxu0 0.0
        %438 = vmatmul.mubr.f32.gmra.mrb[0].mxu0 %v314
        %v439 = vpop.f32.mrb[0].mxu0
        %v440 = vadd.f32 0.0, %v439
        %v441 = vpop.f32.mrb[0].mxu0
        %442 = vmatprep.mubr.f32.mxu0 0.0
        %443 = vmatmul.mubr.f32.gmra.mrb[0].mxu0 %v317
        %v444 = vpop.f32.mrb[0].mxu0
        %v445 = vadd.f32 0.0, %v444
        %v446 = vpop.f32.mrb[0].mxu0
        %447 = vmatprep.mubr.f32.mxu0 0.0
        %448 = vmatmul.mubr.f32.gmra.mrb[0].mxu0 %v320
        %v449 = vpop.f32.mrb[0].mxu0
        %v450 = vadd.f32 0.0, %v449
        %v451 = vpop.f32.mrb[0].mxu0
        %452 = vmatprep.mubr.f32.mxu0 0.0
        %453 = vmatmul.mubr.f32.gmra.mrb[0].mxu0 %v323
        %v454 = vpop.f32.mrb[0].mxu0
        %v455 = vadd.f32 0.0, %v454
        %v456 = vpop.f32.mrb[0].mxu0
        %457 = vmatprep.mubr.f32.mxu0 0.0
        %458 = vmatmul.mubr.f32.gmra.mrb[0].mxu0 %v326
        %v459 = vpop.f32.mrb[0].mxu0
        %v460 = vadd.f32 0.0, %v459
        %v461 = vpop.f32.mrb[0].mxu0
        %462 = vmatprep.mubr.f32.mxu0 0.0
        %463 = vmatmul.mubr.f32.gmra.mrb[0].mxu0 %v329
        %v464 = vpop.f32.mrb[0].mxu0
        %v465 = vadd.f32 0.0, %v464
        %v466 = vpop.f32.mrb[0].mxu0
        %467 = vmatprep.mubr.f32.mxu0 0.0
        %468 = vmatmul.mubr.f32.gmra.mrb[0].mxu0 %v332
        %v469 = vpop.f32.mrb[0].mxu0
        %v470 = vadd.f32 0.0, %v469
        %v471 = vpop.f32.mrb[0].mxu0
        %472 = vmatprep.mubr.f32.mxu0 0.0
        %473 = vmatmul.mubr.f32.gmra.mrb[0].mxu0 %v335
        %v474 = vpop.f32.mrb[0].mxu0
        %v475 = vadd.f32 0.0, %v474
        %v476 = vpop.f32.mrb[0].mxu0
        %477 = vmatprep.mubr.f32.mxu0 0.0
        %478 = vmatmul.mubr.f32.gmra.mrb[0].mxu0 %v338
        %v479 = vpop.f32.mrb[0].mxu0
        %v480 = vadd.f32 0.0, %v479
        %v481 = vpop.f32.mrb[0].mxu0
        %482 = vmatprep.mubr.f32.mxu0 0.0
        %483 = vmatmul.mubr.f32.gmra.mrb[0].mxu0 %v341
        %v484 = vpop.f32.mrb[0].mxu0
        %v485 = vadd.f32 0.0, %v484
        %v486 = vpop.f32.mrb[0].mxu0
        %487 = vdwg.mxu0
        %488 = vst [vmem:[%s249] sm:$0xff] %v410
        %489 = vst [vmem:[%s249 + $0x8] sm:$0xff] %v415
        %490 = vst [vmem:[%s249 + $0x10] sm:$0xff] %v420
        %491 = vst [vmem:[%s249 + $0x18] sm:$0xff] %v425
        %492 = vst [vmem:[%s249 + $0x20] sm:$0xff] %v430
        %493 = vst [vmem:[%s249 + $0x28] sm:$0xff] %v435
        %494 = vst [vmem:[%s249 + $0x30] sm:$0xff] %v440
        %495 = vst [vmem:[%s249 + $0x38] sm:$0xff] %v445
        %496 = vst [vmem:[%s249 + $0x40] sm:$0xff] %v450
        %497 = vst [vmem:[%s249 + $0x48] sm:$0xff] %v455
        %498 = vst [vmem:[%s249 + $0x50] sm:$0xff] %v460
        %499 = vst [vmem:[%s249 + $0x58] sm:$0xff] %v465
        %500 = vst [vmem:[%s249 + $0x60] sm:$0xff] %v470
        %501 = vst [vmem:[%s249 + $0x68] sm:$0xff] %v475
        %502 = vst [vmem:[%s249 + $0x70] sm:$0xff] %v480
        %503 = vst [vmem:[%s249 + $0x78] sm:$0xff] %v485
        %v504 = vld [vmem:[%s2] sm:$0x1]
        %v506 = vlaneseq
        %v507 = vshrl.u32 %v506, 7
        %v508 = vsub.s32 0, %v507
        %v509 = vrot.slane %v504, %v508
        %v511 = vmul.f32 %v410, %v509
        %v512 = vmul.f32 %v415, %v509
        %v513 = vmul.f32 %v420, %v509
        %v514 = vmul.f32 %v425, %v509
        %v515 = vmul.f32 %v430, %v509
        %v516 = vmul.f32 %v435, %v509
        %v517 = vmul.f32 %v440, %v509
        %v518 = vmul.f32 %v445, %v509
        %v519 = vmul.f32 %v450, %v509
        %v520 = vmul.f32 %v455, %v509
        %v521 = vmul.f32 %v460, %v509
        %v522 = vmul.f32 %v465, %v509
        %v523 = vmul.f32 %v470, %v509
        %v524 = vmul.f32 %v475, %v509
        %v525 = vmul.f32 %v480, %v509
        %v526 = vmul.f32 %v485, %v509
        %527 = vadd.xlane.f32.xlu0 %v511
        %v528 = vpop.xlane.xlu0 %527
        %529 = vadd.xlane.f32.xlu0 %v512
        %v530 = vpop.xlane.xlu0 %529
        %531 = vadd.xlane.f32.xlu0 %v513
        %v532 = vpop.xlane.xlu0 %531
        %533 = vadd.xlane.f32.xlu0 %v514
        %v534 = vpop.xlane.xlu0 %533
        %535 = vadd.xlane.f32.xlu0 %v515
        %v536 = vpop.xlane.xlu0 %535
        %537 = vadd.xlane.f32.xlu0 %v516
        %v538 = vpop.xlane.xlu0 %537
        %539 = vadd.xlane.f32.xlu0 %v517
        %v540 = vpop.xlane.xlu0 %539
        %541 = vadd.xlane.f32.xlu0 %v518
        %v542 = vpop.xlane.xlu0 %541
        %543 = vadd.xlane.f32.xlu0 %v519
        %v544 = vpop.xlane.xlu0 %543
        %545 = vadd.xlane.f32.xlu0 %v520
        %v546 = vpop.xlane.xlu0 %545
        %547 = vadd.xlane.f32.xlu0 %v521
        %v548 = vpop.xlane.xlu0 %547
        %549 = vadd.xlane.f32.xlu0 %v522
        %v550 = vpop.xlane.xlu0 %549
        %551 = vadd.xlane.f32.xlu0 %v523
        %v552 = vpop.xlane.xlu0 %551
        %553 = vadd.xlane.f32.xlu0 %v524
        %v554 = vpop.xlane.xlu0 %553
        %555 = vadd.xlane.f32.xlu0 %v525
        %v556 = vpop.xlane.xlu0 %555
        %557 = vadd.xlane.f32.xlu0 %v526
        %v558 = vpop.xlane.xlu0 %557
        %vm559 = vcmask 7168
        %560 = vst.msk [vmem:[%s274] sm:$0xff] %vm559, %v528
        %561 = vst.msk [vmem:[%s274 + $0x8] sm:$0xff] %vm559, %v530
        %562 = vst.msk [vmem:[%s274 + $0x10] sm:$0xff] %vm559, %v532
        %563 = vst.msk [vmem:[%s274 + $0x18] sm:$0xff] %vm559, %v534
        %564 = vst.msk [vmem:[%s274 + $0x20] sm:$0xff] %vm559, %v536
        %565 = vst.msk [vmem:[%s274 + $0x28] sm:$0xff] %vm559, %v538
        %566 = vst.msk [vmem:[%s274 + $0x30] sm:$0xff] %vm559, %v540
        %567 = vst.msk [vmem:[%s274 + $0x38] sm:$0xff] %vm559, %v542
        %568 = vst.msk [vmem:[%s274 + $0x40] sm:$0xff] %vm559, %v544
        %569 = vst.msk [vmem:[%s274 + $0x48] sm:$0xff] %vm559, %v546
        %570 = vst.msk [vmem:[%s274 + $0x50] sm:$0xff] %vm559, %v548
        %571 = vst.msk [vmem:[%s274 + $0x58] sm:$0xff] %vm559, %v550
        %572 = vst.msk [vmem:[%s274 + $0x60] sm:$0xff] %vm559, %v552
        %573 = vst.msk [vmem:[%s274 + $0x68] sm:$0xff] %vm559, %v554
        %574 = vst.msk [vmem:[%s274 + $0x70] sm:$0xff] %vm559, %v556
        %575 = vst.msk [vmem:[%s274 + $0x78] sm:$0xff] %vm559, %v558
        %v576 = vld [vmem:[%s3] sm:$0x1]
        %577 = vmatprep.subr.mxu0 0.0
        %578 = vmatpush1.xpose.msra.mxu0 %v410
        %579 = vmatprep.subr.mxu0 0.0
        %580 = vmatpush1.xpose.msra.mxu0 %v415
        %581 = vmatprep.subr.mxu0 0.0
        %582 = vmatpush1.xpose.msra.mxu0 %v420
        %583 = vmatprep.subr.mxu0 0.0
        %584 = vmatpush1.xpose.msra.mxu0 %v425
        %585 = vmatprep.subr.mxu0 0.0
        %586 = vmatpush1.xpose.msra.mxu0 %v430
        %587 = vmatprep.subr.mxu0 0.0
        %588 = vmatpush1.xpose.msra.mxu0 %v435
        %589 = vmatprep.subr.mxu0 0.0
        %590 = vmatpush1.xpose.msra.mxu0 %v440
        %591 = vmatprep.subr.mxu0 0.0
        %592 = vmatpush1.xpose.msra.mxu0 %v445
        %593 = vmatprep.subr.mxu0 0.0
        %594 = vmatpush1.xpose.msra.mxu0 %v450
        %595 = vmatprep.subr.mxu0 0.0
        %596 = vmatpush1.xpose.msra.mxu0 %v455
        %597 = vmatprep.subr.mxu0 0.0
        %598 = vmatpush1.xpose.msra.mxu0 %v460
        %599 = vmatprep.subr.mxu0 0.0
        %600 = vmatpush1.xpose.msra.mxu0 %v465
        %601 = vmatprep.subr.mxu0 0.0
        %602 = vmatpush1.xpose.msra.mxu0 %v470
        %603 = vmatprep.subr.mxu0 0.0
        %604 = vmatpush1.xpose.msra.mxu0 %v475
        %605 = vmatprep.subr.mxu0 0.0
        %606 = vmatpush1.xpose.msra.mxu0 %v480
        %607 = vmatprep.subr.mxu0 0.0
        %608 = vmatpush1.xpose.msra.mxu0 %v485
        %609 = vmatprep.subr.mxu0 0.0
        %610 = vmatpush1.xpose.msra.mxu0 0.0
        %611 = vmatprep.subr.mxu0 0.0
        %612 = vmatpush1.xpose.msra.mxu0 0.0
        %613 = vmatprep.subr.mxu0 0.0
        %614 = vmatpush1.xpose.msra.mxu0 0.0
        %615 = vmatprep.subr.mxu0 0.0
        %616 = vmatpush1.xpose.msra.mxu0 0.0
        %617 = vmatprep.subr.mxu0 0.0
        %618 = vmatpush1.xpose.msra.mxu0 0.0
        %619 = vmatprep.subr.mxu0 0.0
        %620 = vmatpush1.xpose.msra.mxu0 0.0
        %621 = vmatprep.subr.mxu0 0.0
        %622 = vmatpush1.xpose.msra.mxu0 0.0
        %623 = vmatprep.subr.mxu0 0.0
        %624 = vmatpush1.xpose.msra.mxu0 0.0
        %625 = vmatprep.subr.mxu0 0.0
        %626 = vmatpush1.xpose.msra.mxu0 0.0
        %627 = vmatprep.subr.mxu0 0.0
        %628 = vmatpush1.xpose.msra.mxu0 0.0
        %629 = vmatprep.subr.mxu0 0.0
        %630 = vmatpush1.xpose.msra.mxu0 0.0
        %631 = vmatprep.subr.mxu0 0.0
        %632 = vmatpush1.xpose.msra.mxu0 0.0
        %633 = vmatprep.subr.mxu0 0.0
        %634 = vmatpush1.xpose.msra.mxu0 0.0
        %635 = vmatprep.subr.mxu0 0.0
        %636 = vmatpush1.xpose.msra.mxu0 0.0
        %637 = vmatprep.subr.mxu0 0.0
        %638 = vmatpush1.xpose.msra.mxu0 0.0
        %639 = vmatprep.subr.mxu0 0.0
        %640 = vmatpush1.xpose.msra.mxu0 0.0
        %641 = vmatprep.mubr.f32.mxu0 0.0
        %642 = vmatmul.mubr.f32.gmra.mrb[0].mxu0 %v576
        %v643 = vpop.f32.mrb[0].mxu0
        %v644 = vadd.f32 0.0, %v643
        %v645 = vpop.f32.mrb[0].mxu0
        %646 = vdwg.mxu0
        %647 = vst [vmem:[%s262] sm:$0x1] %v644
        %s648 = sand.u32 %s121, 1
        %s649 = scalar_lea.sflag [#allocation3], %s648
        %s650 = sand.u32 %s121, 1
        %s651 = smul.addr %s650, 128
        %s652 = scalar_lea.vmem [#allocation2], %s651
        %s653 = smul.u32 16, %s24
        %p654 = scmp.lt.s32.totalorder %s653, 47
        %s655 = scalar_select %p654, %s653, 47
        %s656 = smul.addr %s655, 8
        %s657 = scalar_lea.vmem %s5, %s656
        %s658 = sand.u32 %s173, 1
        %s659 = scalar_lea.sflag [#allocation5], %s658
        %s660 = sand.u32 %s173, 1
        %s661 = scalar_lea.vmem [#allocation4], %s660
        // Predicated region
        $region37: #{tpu_custom_call.1} parent=35 // pred_check
          %p662 = pneg %p131
        $region38: #{tpu_custom_call.1} parent=35 // pred_check_branch
          %664 = sbr.rel (%p662) target = $region40
        $region39: #{tpu_custom_call.1} parent=35 // pred_region
          %s665 = smul.u32 16, %s24
          %s667 = ssub.s32 2048, 2048
          %668 = vsyncadd %s649, %s667
          %s669 = smul.addr %s665, 128
          %s670 = scalar_lea.hbm %s4, %s669
          %s671 = sshll.u32 %s652, 4
          %s672 = int_to_ptr.vmem [resolvable:$true] %s671
          %677 = dma.vmem_to_hbm [thread:$0]  %s672, 2048, %s670, %s649, 128, 128, 8
        $region40: #{tpu_custom_call.1} parent=35 // pred_fallthru
          _
        // Predicated region
        $region41: #{tpu_custom_call.1} parent=35 // pred_check
          %p678 = pneg %p157
        $region42: #{tpu_custom_call.1} parent=35 // pred_check_branch
          %680 = sbr.rel (%p678) target = $region44
        $region43: #{tpu_custom_call.1} parent=35 // pred_region
          %s681 = smul.u32 16, %s24
        $region44: #{tpu_custom_call.1} parent=35 // pred_fallthru
          _
        // Predicated region
        $region45: #{tpu_custom_call.1} parent=35 // pred_check
          %p682 = pneg %p183
        $region46: #{tpu_custom_call.1} parent=35 // pred_check_branch
          %684 = sbr.rel (%p682) target = $region48
        $region47: #{tpu_custom_call.1} parent=35 // pred_region
          %s686 = ssub.s32 16, 16
          %687 = vsyncadd %s659, %s686
          %s688 = smul.addr %s24, 16
          %s689 = scalar_lea.hbm %s6, %s688
          %s691 = sshll.u32 %s661, 4
          %s692 = int_to_ptr.vmem [resolvable:$true] %s691
          %694 = dma.vmem_to_hbm [thread:$0]  %s692, 16, %s689, %s659
        $region48: #{tpu_custom_call.1} parent=35 // pred_fallthru
          _
      $region36: #{tpu_custom_call.1} parent=5 // pred_fallthru
        _
      %p695 = scmp.le.s32.totalorder 2, %s19
      // Predicated region
      $region49: #{tpu_custom_call.1} parent=5 // pred_check
        %p696 = pneg %p695
      $region50: #{tpu_custom_call.1} parent=5 // pred_check_branch
        %698 = sbr.rel (%p696) target = $region52
      $region51: #{tpu_custom_call.1} parent=5 // pred_region
        %s699 = ssub.s32 %s19, 2
        // Predicated region
        $region53: #{tpu_custom_call.1} parent=51 // pred_check
          %p700 = pneg %p137
        $region54: #{tpu_custom_call.1} parent=51 // pred_check_branch
          %702 = sbr.rel (%p700) target = $region56
        $region55: #{tpu_custom_call.1} parent=51 // pred_region
          %s703 = sand.u32 %s122, 1
          %s704 = scalar_lea.sflag [#allocation3], %s703
          %s705 = sand.u32 %s122, 1
          %s706 = smul.addr %s705, 128
          %s707 = scalar_lea.vmem [#allocation2], %s706
          %708 = dma.done %s704, 2048
        $region56: #{tpu_custom_call.1} parent=51 // pred_fallthru
          _
        // Predicated region
        $region57: #{tpu_custom_call.1} parent=51 // pred_check
          %p709 = pneg %p163
        $region58: #{tpu_custom_call.1} parent=51 // pred_check_branch
          %711 = sbr.rel (%p709) target = $region60
        $region59: #{tpu_custom_call.1} parent=51 // pred_region
          %s712 = smul.u32 16, %s25
          %p713 = scmp.lt.s32.totalorder %s712, 47
          %s714 = scalar_select %p713, %s712, 47
          %s715 = smul.addr %s714, 8
          %s716 = scalar_lea.vmem %s5, %s715
        $region60: #{tpu_custom_call.1} parent=51 // pred_fallthru
          _
        // Predicated region
        $region61: #{tpu_custom_call.1} parent=51 // pred_check
          %p717 = pneg %p189
        $region62: #{tpu_custom_call.1} parent=51 // pred_check_branch
          %719 = sbr.rel (%p717) target = $region64
        $region63: #{tpu_custom_call.1} parent=51 // pred_region
          %s720 = sand.u32 %s174, 1
          %s721 = scalar_lea.sflag [#allocation5], %s720
          %s722 = sand.u32 %s174, 1
          %s723 = scalar_lea.vmem [#allocation4], %s722
          %724 = dma.done %s721, 16
        $region64: #{tpu_custom_call.1} parent=51 // pred_fallthru
          _
      $region52: #{tpu_custom_call.1} parent=5 // pred_fallthru
        _
    $region6: #{tpu_custom_call.1} parent=1 // loop_footer
      %s23 = sadd.s32 1, %s19
    $region7: #{tpu_custom_call.1} parent=1 // loop_footer_branch
      %18 = sbr.rel target = $region3
    $region8: #{tpu_custom_call.1} parent=1 // loop_exit
      _
    %725 = vsyncpa [#allocation3], 1
    %s726 = scalar_lea.sflag [#allocation3], 1
    %727 = vsyncpa %s726, 1
    %728 = vsyncpa [#allocation5], 1
    %s729 = scalar_lea.sflag [#allocation5], 1
    %730 = vsyncpa %s729, 1

</llo_original>
